<compile_context>
chip_gen: v7x
topology: tpu7x:2x2x1
jax: 0.10.0
libtpu: 0.0.40
codegen_flags: <defaults>
</compile_context>

<pallas_src>
import functools

import jax
import jax.numpy as jnp
from jax.experimental import pallas as pl
from jax.experimental.pallas import tpu as pltpu


_FUSED_VMEM_BUDGET = 44 * 1024 * 1024   # 4 x block bytes must fit (v7x-safe)
_VMEM_SLACK = 4 * 1024 * 1024
_DEFAULT_TILE_HW = 1024                 # multiple of 128 -> lane-dense stores


def _eca_fused_kernel(w_ref, x_ref, o_ref):
    """One batch element: (C, HW) tile in VMEM.  w_ref: (3,) conv taps in SMEM."""
    x = x_ref[...]                                   # (C, HW), input dtype
    c, hw = x.shape

    # Global average pool over the spatial (lane) axis.  Always accumulate in
    # f32 (bf16-safe); the XLU reduce hides under the HBM DMA stream.
    p = jnp.sum(x.astype(jnp.float32), axis=-1, keepdims=True) * (1.0 / hw)  # (C, 1)

    # k=3 cross-correlation along channels, zero padded, no bias:
    #   y[c] = w0 * p[c-1] + w1 * p[c] + w2 * p[c+1]
    idx = jax.lax.broadcasted_iota(jnp.int32, (c, 1), 0)
    p_prev = jnp.where(idx == 0, 0.0, jnp.roll(p, 1, axis=0))
    p_next = jnp.where(idx == c - 1, 0.0, jnp.roll(p, -1, axis=0))
    y = w_ref[0] * p_prev + w_ref[1] * p + w_ref[2] * p_next                 # (C, 1) f32

    # Fused gate: x*sigmoid(y) + x == x*(1+sigmoid(y)) -> one VPU op per pixel.
    s1 = (1.0 + jax.nn.sigmoid(y)).astype(x.dtype)                           # (C, 1)
    o_ref[...] = x * s1


def _eca_gate_kernel(s_ref, x_ref, o_ref):
    """Gating pass: (C, TILE_HW) block scaled by the per-channel gate (C, 1)."""
    o_ref[...] = x_ref[...] * s_ref[...]


def _eca_fused(x2, conv_w):
    B, C, HW = x2.shape
    needed = 4 * C * HW * x2.dtype.itemsize          # 2 in + 2 out VMEM buffers
    vmem_limit = int(min(max(needed + _VMEM_SLACK, 16 << 20), 56 << 20))
    return pl.pallas_call(
        _eca_fused_kernel,
        out_shape=jax.ShapeDtypeStruct((B, C, HW), x2.dtype),
        grid=(B,),
        in_specs=[
            pl.BlockSpec(memory_space=pltpu.MemorySpace.SMEM),       # conv taps
            pl.BlockSpec((None, C, HW), lambda b: (b, 0, 0)),        # x block
        ],
        out_specs=pl.BlockSpec((None, C, HW), lambda b: (b, 0, 0)),
        input_output_aliases={1: 0},                                  # in-place on x
        compiler_params=pltpu.CompilerParams(
            dimension_semantics=("parallel",),
            vmem_limit_bytes=vmem_limit),
    )(conv_w, x2)


def _eca_tiled(x2, conv_w, tile_hw):
    B, C, HW = x2.shape

    # Pass 1: tiny O(B*C) gate (GAP + conv + sigmoid) in plain JAX, f32.
    p = jnp.mean(x2.astype(jnp.float32), axis=-1)                    # (B, C)
    pad = jnp.pad(p, ((0, 0), (1, 1)))
    y = conv_w[0] * pad[:, :-2] + conv_w[1] * pad[:, 1:-1] + conv_w[2] * pad[:, 2:]
    s1 = (1.0 + jax.nn.sigmoid(y)).astype(x2.dtype).reshape(B, C, 1)  # fused gate

    # Pass 2: lane-dense gating kernel.  tile is either a multiple of 128 or
    # the full HW extent; a remainder HW tile is clipped on writeback.
    tile = min(tile_hw, HW)
    n_tiles = pl.cdiv(HW, tile)
    needed = 4 * C * tile * x2.dtype.itemsize + 2 * C * x2.dtype.itemsize
    vmem_limit = int(min(max(needed + _VMEM_SLACK, 16 << 20), 56 << 20))
    return pl.pallas_call(
        _eca_gate_kernel,
        out_shape=jax.ShapeDtypeStruct((B, C, HW), x2.dtype),
        grid=(B, n_tiles),
        in_specs=[
            pl.BlockSpec((None, C, 1), lambda b, t: (b, 0, 0)),      # gate (C,1)
            pl.BlockSpec((None, C, tile), lambda b, t: (b, 0, t)),   # x tile
        ],
        out_specs=pl.BlockSpec((None, C, tile), lambda b, t: (b, 0, t)),
        input_output_aliases={1: 0},                                  # in-place on x
        compiler_params=pltpu.CompilerParams(
            dimension_semantics=("parallel", "parallel"),
            vmem_limit_bytes=vmem_limit),
    )(s1, x2)


@functools.partial(jax.jit, static_argnames=("force_tiled", "tile_hw"))
def eca_forward(x, conv_w, *, force_tiled=False, tile_hw=_DEFAULT_TILE_HW):
    """x: (B, C, H, W) f32 or bf16; conv_w: (3,) Conv1d(1,1,3,bias=False) taps."""
    B, C, H, W = x.shape
    HW = H * W
    x2 = x.reshape(B, C, HW)
    conv_w = conv_w.astype(jnp.float32)
    needed_fused = 4 * C * HW * x2.dtype.itemsize
    if force_tiled or needed_fused > _FUSED_VMEM_BUDGET:
        out = _eca_tiled(x2, conv_w, tile_hw)
    else:
        out = _eca_fused(x2, conv_w)
    return out.reshape(B, C, H, W)


def eca_reference(x, conv_w):
    # Pure-JAX reference mirroring the PyTorch forward: x * sigmoid(conv(gap(x))) + x
    x = x.astype(jnp.float32)
    p = jnp.mean(x, axis=(2, 3))                       # (B, C)
    pad = jnp.pad(p, ((0, 0), (1, 1)))                 # zero pad channel axis
    y = conv_w[0] * pad[:, :-2] + conv_w[1] * pad[:, 1:-1] + conv_w[2] * pad[:, 2:]
    s = jax.nn.sigmoid(y)[:, :, None, None]            # (B, C, 1, 1)
    return x * s + x


if __name__ == "__main__":
    key = jax.random.PRNGKey(0)
    kx, kw = jax.random.split(key)

    B, C, H, W = 2, 4, 16, 16
    x = jax.random.normal(kx, (B, C, H, W), dtype=jnp.float32)

    # Conv1d(1, 1, kernel_size=3, bias=False) weight: shape (1, 1, 3) -> (3,)
    bound = 1.0 / jnp.sqrt(3.0)
    conv_w = jax.random.uniform(kw, (3,), minval=-bound, maxval=bound,
                                dtype=jnp.float32)

    ref = eca_reference(x, conv_w)

    # 1) fused single-pass path (small feature map fits one VMEM block).
    out = jax.block_until_ready(eca_forward(x, conv_w))
    assert out.shape == (B, C, H, W)
    assert jnp.allclose(out, ref, atol=1e-5, rtol=1e-5), "fused f32 mismatch"

    # 2) tiled two-pass path (what large feature maps / v7x take), forced here.
    out_t = jax.block_until_ready(eca_forward(x, conv_w, force_tiled=True, tile_hw=128))
    assert jnp.allclose(out_t, ref, atol=1e-5, rtol=1e-5), "tiled mismatch"

    # 3) bf16 I/O path (halves HBM traffic; GAP still accumulates in f32).
    x_bf = x.astype(jnp.bfloat16)
    out_bf = jax.block_until_ready(eca_forward(x_bf, conv_w))
    ref_bf = eca_reference(x_bf.astype(jnp.float32), conv_w)
    assert jnp.allclose(out_bf.astype(jnp.float32), ref_bf, atol=1e-1, rtol=1e-1), \
        "bf16 mismatch"

    print("KERNEL_OK")
</pallas_src>

<mosaic_0001>
module attributes {stable_mosaic.version = 11 : i64} {
  func.func @_eca_fused_kernel(%arg0: i32, %arg1: memref<3xf32, #tpu.memory_space<smem>>, %arg2: memref<1x4x256xf32, #tpu.memory_space<vmem>>, %arg3: memref<1x4x256xf32, #tpu.memory_space<vmem>>) attributes {dimension_semantics = [#tpu.dimension_semantics<parallel>], iteration_bounds = array<i64: 2>, scalar_prefetch = 0 : i64, scratch_operands = 0 : i64, tpu.core_type = #tpu.core_type<tc>, window_params = [{transform_indices = @transform_0, window_bounds = array<i64: 3>}, {transform_indices = @transform_1, window_bounds = array<i64: 1, 4, 256>}, {transform_indices = @transform_2, window_bounds = array<i64: 1, 4, 256>}]} {
    %c0 = arith.constant 0 : index
    %c0_0 = arith.constant 0 : index
    %c0_1 = arith.constant 0 : index
    %0 = vector.load %arg2[%c0, %c0_0, %c0_1] : memref<1x4x256xf32, #tpu.memory_space<vmem>>, vector<1x4x256xf32>
    %1 = vector.shape_cast %0 : vector<1x4x256xf32> to vector<4x256xf32>
    %cst = arith.constant dense<0.000000e+00> : vector<4xf32>
    %2 = vector.multi_reduction <add>, %1, %cst [1] : vector<4x256xf32> to vector<4xf32>
    %3 = vector.shape_cast %2 : vector<4xf32> to vector<4x1xf32>
    %cst_2 = arith.constant 3.906250e-03 : f32
    %4 = vector.broadcast %cst_2 : f32 to vector<4x1xf32>
    %5 = arith.mulf %3, %4 : vector<4x1xf32>
    %6 = tpu.iota {dimensions = array<i32: 0>} : vector<4x1xi32>
    %c0_i32 = arith.constant 0 : i32
    %7 = vector.broadcast %c0_i32 : i32 to vector<4x1xi32>
    %8 = arith.cmpi eq, %6, %7 : vector<4x1xi32>
    %9 = vector.extract_strided_slice %5 {offsets = [3, 0], sizes = [1, 1], strides = [1, 1]} : vector<4x1xf32> to vector<1x1xf32>
    %10 = vector.extract_strided_slice %5 {offsets = [0, 0], sizes = [3, 1], strides = [1, 1]} : vector<4x1xf32> to vector<3x1xf32>
    %11 = tpu.concatenate %9, %10 in 0 : vector<1x1xf32>, vector<3x1xf32> -> vector<4x1xf32>
    %cst_3 = arith.constant 0.000000e+00 : f32
    %12 = vector.broadcast %cst_3 : f32 to vector<4x1xf32>
    %13 = arith.select %8, %12, %11 : vector<4x1xi1>, vector<4x1xf32>
    %c3_i32 = arith.constant 3 : i32
    %14 = vector.broadcast %c3_i32 : i32 to vector<4x1xi32>
    %15 = arith.cmpi eq, %6, %14 : vector<4x1xi32>
    %16 = vector.extract_strided_slice %5 {offsets = [1, 0], sizes = [3, 1], strides = [1, 1]} : vector<4x1xf32> to vector<3x1xf32>
    %17 = vector.extract_strided_slice %5 {offsets = [0, 0], sizes = [1, 1], strides = [1, 1]} : vector<4x1xf32> to vector<1x1xf32>
    %18 = tpu.concatenate %16, %17 in 0 : vector<3x1xf32>, vector<1x1xf32> -> vector<4x1xf32>
    %cst_4 = arith.constant 0.000000e+00 : f32
    %19 = vector.broadcast %cst_4 : f32 to vector<4x1xf32>
    %20 = arith.select %15, %19, %18 : vector<4x1xi1>, vector<4x1xf32>
    %c0_5 = arith.constant 0 : index
    %21 = memref.load %arg1[%c0_5] : memref<3xf32, #tpu.memory_space<smem>>
    %22 = vector.broadcast %21 : f32 to vector<4x1xf32>
    %23 = arith.mulf %22, %13 : vector<4x1xf32>
    %c1 = arith.constant 1 : index
    %24 = memref.load %arg1[%c1] : memref<3xf32, #tpu.memory_space<smem>>
    %25 = vector.broadcast %24 : f32 to vector<4x1xf32>
    %26 = arith.mulf %25, %5 : vector<4x1xf32>
    %27 = arith.addf %23, %26 : vector<4x1xf32>
    %c2 = arith.constant 2 : index
    %28 = memref.load %arg1[%c2] : memref<3xf32, #tpu.memory_space<smem>>
    %29 = vector.broadcast %28 : f32 to vector<4x1xf32>
    %30 = arith.mulf %29, %20 : vector<4x1xf32>
    %31 = arith.addf %27, %30 : vector<4x1xf32>
    %32 = arith.negf %31 : vector<4x1xf32>
    %33 = math.exp %32 : vector<4x1xf32>
    %cst_6 = arith.constant 1.000000e+00 : f32
    %34 = vector.broadcast %cst_6 : f32 to vector<4x1xf32>
    %35 = arith.addf %34, %33 : vector<4x1xf32>
    %36 = arith.divf %34, %35 : vector<4x1xf32>
    %cst_7 = arith.constant 1.000000e+00 : f32
    %37 = vector.broadcast %cst_7 : f32 to vector<4x1xf32>
    %38 = arith.addf %37, %36 : vector<4x1xf32>
    %39 = vector.broadcast %38 : vector<4x1xf32> to vector<4x256xf32>
    %40 = arith.mulf %1, %39 : vector<4x256xf32>
    %c0_8 = arith.constant 0 : index
    %c0_9 = arith.constant 0 : index
    %c0_10 = arith.constant 0 : index
    %41 = vector.load %arg3[%c0_8, %c0_9, %c0_10] : memref<1x4x256xf32, #tpu.memory_space<vmem>>, vector<1x4x256xf32>
    %42 = vector.shape_cast %41 : vector<1x4x256xf32> to vector<4x256xf32>
    %43 = vector.shape_cast %40 : vector<4x256xf32> to vector<1x4x256xf32>
    tpu.vector_store %arg3[%c0_8, %c0_9, %c0_10], %43 {strides = array<i32>} : memref<1x4x256xf32, #tpu.memory_space<vmem>>, vector<1x4x256xf32>,
    return
  }
  func.func @transform_0(%arg0: i32) -> i32 {
    %c0_i32 = arith.constant 0 : i32
    %c0_i32_0 = arith.constant 0 : i32
    return %c0_i32 : i32
  }
  func.func @transform_1(%arg0: i32) -> (i32, i32, i32) {
    %c0_i32 = arith.constant 0 : i32
    %c0_i32_0 = arith.constant 0 : i32
    %c0_i32_1 = arith.constant 0 : i32
    return %arg0, %c0_i32, %c0_i32_0 : i32, i32, i32
  }
  func.func @transform_2(%arg0: i32) -> (i32, i32, i32) {
    %c0_i32 = arith.constant 0 : i32
    %c0_i32_0 = arith.constant 0 : i32
    %c0_i32_1 = arith.constant 0 : i32
    return %arg0, %c0_i32, %c0_i32_0 : i32, i32, i32
  }
}

</mosaic_0001>

<llo_original>
// kernel: eca_forward.1
$region0: #{eca_forward.1}
  #allocation0 [shape = 'u32[]', space=smem, size = 0x4, offset = 0x4, fixed_abs, tag = 'smem constant byte address 0x4 - core index']
  #allocation1 [shape = 'u32[144,128]{1,0:T(1,128)}', space=vmem, size = 0x12000, scoped, tag = 'internal scratch']
  %s0 = inlined_call_operand.vmem [shape: f32[3], index: 0, kind: input, shape index: {}]
  %s1 = inlined_call_operand.vmem [shape: f32[2,4,256], index: 1, kind: input, shape index: {}, may-alias: {1,2}]
  %s2 = inlined_call_operand.vmem [shape: f32[2,4,256], index: 2, kind: output, shape index: {}, may-alias: {1,2}]
  %s3 = sld [smem:[#allocation0]]
  $region45: #{eca_forward.1} parent=0
    _
  %s5 = ssub.s32 1, %s3
  %s6 = scalar_select 0, %s5, %s3
  $region1: #{eca_forward.1} parent=0
    #allocation2 [shape = 'u8[512]{0}', space=smem, size = 0x200, scoped, tag = 'input window, operand 0, single buffered']
    #allocation3 [shape = 's32[2]{0}', space=sflag, size = 0x8, scoped, tag = 'scoped memory for eca_forward.1']
    %7 = vsyncpa [#allocation3], 0
    loop: start=0, step=1, limit=4
    $region2: #{eca_forward.1} parent=1 // loop_pre_header
      _
    $region3: #{eca_forward.1} parent=1 // loop_header
      %s9 = sphi 0, %s13
      %p10 = scmp.ge.s32.totalorder %s9, 4
      %s17 = sphi 0, %s17
      %s19 = sphi 0, %s17
      %s20 = sphi 0, %s19
      %s34 = sphi 0, %s20
      %s40 = sphi 0, %s42
      %s43 = sphi 0, %s40
      %s44 = sphi 0, %s43
      %s60 = sphi 0, %s44
      %s66 = sphi 0, %s68
      %s69 = sphi 0, %s66
      %s70 = sphi 0, %s69
      %s86 = sphi 0, %s70
    $region4: #{eca_forward.1} parent=1 // loop_header_branch
      %12 = sbr.rel (%p10) target = $region8
    $region5: #{eca_forward.1} parent=1 // loop_body
      %s14 = ssub.s32 %s9, 1
      %s15 = ssub.s32 %s9, 2
      %s16 = sadd.s32 %s9, 1
      %s18 = sadd.s32 %s17, 1
      %p21 = scmp.eq.s32.totalorder %s9, 1
      %p22 = scmp.ne.s32.totalorder %s17, %s19
      %p23 = scmp.eq.s32.totalorder %s9, 0
      %p24 = por %p22, %p23
      %p25 = scmp.ne.s32.totalorder %s17, %s19
      %p26 = scmp.eq.s32.totalorder %s14, 1
      %p27 = por %p25, %p26
      %p28 = scmp.ne.s32.totalorder %s19, %s20
      %p29 = scmp.eq.s32.totalorder %s14, 0
      %p30 = por %p28, %p29
      %p31 = scmp.ne.s32.totalorder %s19, %s20
      %p32 = scmp.eq.s32.totalorder %s15, 1
      %p33 = por %p31, %p32
      %p35 = scmp.ne.s32.totalorder %s20, %s34
      %p36 = scmp.eq.s32.totalorder %s15, 0
      %p37 = por %p35, %p36
      %s38 = ssub.s32 %s9, %s16
      %p39 = scmp.eq.s32.totalorder %s38, 0
      %s41 = sadd.s32 %s40, 1
      %s42 = scalar_select %p39, %s40, %s41
      %p45 = pneg %p39
      %p46 = scmp.eq.s32.totalorder %s9, 1
      %p47 = por %p45, %p46
      %p48 = scmp.ne.s32.totalorder %s40, %s43
      %p49 = scmp.eq.s32.totalorder %s9, 0
      %p50 = por %p48, %p49
      %p51 = scmp.ne.s32.totalorder %s40, %s43
      %p52 = scmp.eq.s32.totalorder %s14, 1
      %p53 = por %p51, %p52
      %p54 = scmp.ne.s32.totalorder %s43, %s44
      %p55 = scmp.eq.s32.totalorder %s14, 0
      %p56 = por %p54, %p55
      %p57 = scmp.ne.s32.totalorder %s43, %s44
      %p58 = scmp.eq.s32.totalorder %s15, 1
      %p59 = por %p57, %p58
      %p61 = scmp.ne.s32.totalorder %s44, %s60
      %p62 = scmp.eq.s32.totalorder %s15, 0
      %p63 = por %p61, %p62
      %s64 = ssub.s32 %s9, %s16
      %p65 = scmp.eq.s32.totalorder %s64, 0
      %s67 = sadd.s32 %s66, 1
      %s68 = scalar_select %p65, %s66, %s67
      %p71 = pneg %p65
      %p72 = scmp.eq.s32.totalorder %s9, 1
      %p73 = por %p71, %p72
      %p74 = scmp.ne.s32.totalorder %s66, %s69
      %p75 = scmp.eq.s32.totalorder %s9, 0
      %p76 = por %p74, %p75
      %p77 = scmp.ne.s32.totalorder %s66, %s69
      %p78 = scmp.eq.s32.totalorder %s14, 1
      %p79 = por %p77, %p78
      %p80 = scmp.ne.s32.totalorder %s69, %s70
      %p81 = scmp.eq.s32.totalorder %s14, 0
      %p82 = por %p80, %p81
      %p83 = scmp.ne.s32.totalorder %s69, %s70
      %p84 = scmp.eq.s32.totalorder %s15, 1
      %p85 = por %p83, %p84
      %p87 = scmp.ne.s32.totalorder %s70, %s86
      %p88 = scmp.eq.s32.totalorder %s15, 0
      %p89 = por %p87, %p88
      %p90 = scmp.le.s32.totalorder 1, %s9
      %p91 = scmp.lt.s32.totalorder %s9, 3
      %p92 = pnand %p90, %p91
      %p93 = pneg %p92
      // Predicated region
      $region9: #{eca_forward.1} parent=5 // pred_check
        _
      $region10: #{eca_forward.1} parent=5 // pred_check_branch
        %95 = sbr.rel (%p92) target = $region12
      $region11: #{eca_forward.1} parent=5 // pred_region
        %s96 = ssub.s32 %s9, 1
        // Predicated region
        $region13: #{eca_forward.1} parent=11 // pred_check
          %p97 = pneg %p30
        $region14: #{eca_forward.1} parent=11 // pred_check_branch
          %99 = sbr.rel (%p97) target = $region16
        $region15: #{eca_forward.1} parent=11 // pred_region
          %s101 = ssub.s32 16, 16
          %102 = vsyncadd [#allocation3], %s101
          %s104 = sshll.u32 %s0, 4
          %s105 = int_to_ptr.vmem [resolvable:$true] %s104
          %107 = dma.vmem_to_smem %s105, 16, [#allocation2], [#allocation3]
        $region16: #{eca_forward.1} parent=11 // pred_fallthru
          _
      $region12: #{eca_forward.1} parent=5 // pred_fallthru
        _
      %p108 = scmp.lt.s32.totalorder %s9, 2
      // Predicated region
      $region17: #{eca_forward.1} parent=5 // pred_check
        %p109 = pneg %p108
      $region18: #{eca_forward.1} parent=5 // pred_check_branch
        %111 = sbr.rel (%p109) target = $region20
      $region19: #{eca_forward.1} parent=5 // pred_region
        // Predicated region
        $region21: #{eca_forward.1} parent=19 // pred_check
          %p112 = pneg %p50
        $region22: #{eca_forward.1} parent=19 // pred_check_branch
          %114 = sbr.rel (%p112) target = $region24
        $region23: #{eca_forward.1} parent=19 // pred_region
          %p115 = scmp.lt.s32.totalorder %s9, 1
          %s116 = scalar_select %p115, %s9, 1
          %s117 = smul.addr %s116, 2
          %s118 = smul.addr %s117, 4
          %s119 = scalar_lea.vmem %s1, %s118
        $region24: #{eca_forward.1} parent=19 // pred_fallthru
          _
      $region20: #{eca_forward.1} parent=5 // pred_fallthru
        _
      %p120 = scmp.le.s32.totalorder 1, %s9
      %p121 = scmp.lt.s32.totalorder %s9, 3
      %p122 = pnand %p120, %p121
      %p123 = pneg %p122
      // Predicated region
      $region25: #{eca_forward.1} parent=5 // pred_check
        _
      $region26: #{eca_forward.1} parent=5 // pred_check_branch
        %125 = sbr.rel (%p122) target = $region28
      $region27: #{eca_forward.1} parent=5 // pred_region
        %s126 = ssub.s32 %s9, 1
        // Predicated region
        $region29: #{eca_forward.1} parent=27 // pred_check
          %p127 = pneg %p30
        $region30: #{eca_forward.1} parent=27 // pred_check_branch
          %129 = sbr.rel (%p127) target = $region32
        $region31: #{eca_forward.1} parent=27 // pred_region
          %130 = dma.done [#allocation3], 16
        $region32: #{eca_forward.1} parent=27 // pred_fallthru
          _
        %131 = sfence
        %p132 = pneg %p30
        %p133 = pneg %p27
        %p134 = scmp.lt.s32.totalorder %s14, 1
        %s135 = scalar_select %p134, %s14, 1
        %s136 = smul.addr %s135, 2
        %s137 = smul.addr %s136, 4
        %s138 = scalar_lea.vmem %s1, %s137
        %p139 = pneg %p56
        %p140 = pneg %p53
        %p141 = pneg %p82
        %p142 = pneg %p79
        %p143 = scmp.lt.s32.totalorder %s14, 1
        %s144 = scalar_select %p143, %s14, 1
        %s145 = smul.addr %s144, 2
        %s146 = smul.addr %s145, 4
        %s147 = scalar_lea.vmem %s2, %s146
        %p148 = scmp.lt.s32.totalorder %s14, 1
        %s149 = scalar_select %p148, %s14, 1
        %s150 = smul.addr %s149, 2
        %s151 = smul.addr %s150, 4
        %s152 = scalar_lea.vmem %s1, %s151
        %p153 = scmp.lt.s32.totalorder %s14, 1
        %s154 = scalar_select %p153, %s14, 1
        %s155 = smul.addr %s154, 2
        %s156 = smul.addr %s155, 4
        %s157 = scalar_lea.vmem %s2, %s156
        %v158 = vld [vmem:[%s152] sm:$0xff]
        %v160 = vcombine.high %v158, %v158
        %vm162 = vcmask 1043456
        %v163 = vsel %vm162, %v158, 0.0
        %v164 = vsel %vm162, %v160, 0.0
        %v165 = vadd.f32 %v163, %v164
        %166 = vadd.xlane.f32.xlu0 %v165
        %v167 = vpop.xlane.xlu0 %166
        %v168 = vmul.f32 %v167, 0.00390625
        %v169 = vlaneseq
        %v170 = vshrl.u32 %v169, 7
        %vm171 = vcmp.eq.s32.totalorder %v170, 0
        %v173 = vrot.slane %v168, 3
        %v175 = vrot.slane %v168, 7
        %vm177 = vcmask 1040384
        %v178 = vsel %vm177, %v173, %v175
        %v179 = vsel %vm171, 0.0, %v178
        %vm180 = vcmp.eq.s32.totalorder %v170, 3
        %v181 = vrot.slane %v168, 1
        %v183 = vrot.slane %v168, 5
        %vm185 = vcmask 1042432
        %v186 = vsel %vm185, %v181, %v183
        %v187 = vsel %vm180, 0.0, %v186
        %s188 = sld [smem:[#allocation2]]
        %v189 = vstv %s188
        %v190 = vmul.f32 %v189, %v179
        %s191 = sld [smem:[#allocation2 + $0x1]]
        %v192 = vstv %s191
        %v193 = vmul.f32 %v192, %v168
        %v194 = vadd.f32 %v190, %v193
        %s195 = sld [smem:[#allocation2 + $0x2]]
        %v196 = vstv %s195
        %v197 = vmul.f32 %v196, %v187
        %v198 = vadd.f32 %v194, %v197
        %v199 = vxor.u32 %v198, 2147483648
        %v200 = vmul.f32 %v199, 1.442695
        %v201 = vpow.pop %v200
        %v202 = vadd.f32 %v201, 1.0
        %v203 = vrcp.pop %v202
        %v204 = vmul.f32 1.0, %v203
        %v205 = vadd.f32 %v204, 1.0
        %207 = vset.pattern.permute.xlu0 0
        %208 = vperm.xlu0 %207, %v205
        %v209 = vpop.permute.xlu0 %208
        %v211 = vunpack.c.l.s4 839922192
        %v212 = vunpack.c.0.s8 %v211
        %v213 = vlaneseq
        %v214 = vshrl.u32 %v213, 7
        %v215 = vsub.s32 %v212, %v214
        %v216 = vrot.slane %v209, %v215
        %v218 = vmul.f32 %v158, %v216
        %219 = vst [vmem:[%s157] sm:$0xff] %v218
        %p220 = scmp.lt.s32.totalorder %s14, 1
        %s221 = scalar_select %p220, %s14, 1
        %s222 = smul.addr %s221, 2
        %s223 = smul.addr %s222, 4
        %s224 = scalar_lea.vmem %s2, %s223
        // Predicated region
        $region33: #{eca_forward.1} parent=27 // pred_check
          %p225 = pneg %p79
        $region34: #{eca_forward.1} parent=27 // pred_check_branch
          %227 = sbr.rel (%p225) target = $region36
        $region35: #{eca_forward.1} parent=27 // pred_region
          _
        $region36: #{eca_forward.1} parent=27 // pred_fallthru
          _
      $region28: #{eca_forward.1} parent=5 // pred_fallthru
        _
      %p228 = scmp.le.s32.totalorder 2, %s9
      // Predicated region
      $region37: #{eca_forward.1} parent=5 // pred_check
        %p229 = pneg %p228
      $region38: #{eca_forward.1} parent=5 // pred_check_branch
        %231 = sbr.rel (%p229) target = $region40
      $region39: #{eca_forward.1} parent=5 // pred_region
        %s232 = ssub.s32 %s9, 2
        // Predicated region
        $region41: #{eca_forward.1} parent=39 // pred_check
          %p233 = pneg %p85
        $region42: #{eca_forward.1} parent=39 // pred_check_branch
          %235 = sbr.rel (%p233) target = $region44
        $region43: #{eca_forward.1} parent=39 // pred_region
          %p236 = scmp.lt.s32.totalorder %s15, 1
          %s237 = scalar_select %p236, %s15, 1
          %s238 = smul.addr %s237, 2
          %s239 = smul.addr %s238, 4
          %s240 = scalar_lea.vmem %s2, %s239
        $region44: #{eca_forward.1} parent=39 // pred_fallthru
          _
      $region40: #{eca_forward.1} parent=5 // pred_fallthru
        _
    $region6: #{eca_forward.1} parent=1 // loop_footer
      %s13 = sadd.s32 1, %s9
    $region7: #{eca_forward.1} parent=1 // loop_footer_branch
      %8 = sbr.rel target = $region3
    $region8: #{eca_forward.1} parent=1 // loop_exit
      _
    %241 = vsyncpa [#allocation3], 1
    %s242 = scalar_lea.sflag [#allocation3], 1
    %243 = vsyncpa %s242, 1

</llo_original>
